<compile_context>
chip_gen: v7x
topology: tpu7x:2x2x1
jax: 0.10.0
libtpu: 0.0.40
codegen_flags: <defaults>
</compile_context>

<pallas_src>
import functools

import jax
import jax.numpy as jnp
from jax import lax
from jax.experimental import pallas as pl
from jax.experimental.pallas import tpu as pltpu

LANE = 128
MAX_ROW_TILE = 2048   # rows per grid step: 1 MiB f32 per input per step
CHUNK_ROWS = 256      # rows folded per inner-loop iteration


def _round_up(a, b):
    return -(-a // b) * b


def _dice_bce_kernel(x_ref, t_ref, o_ref, *, n_rows, row_tile, chunk_rows,
                     n_chunks, steps_per_split):
    """Accumulates [intersection, sum(p), sum(t), sum(bce)] partial sums into
    the resident (1,4,8,128) f32 output block of this split."""
    c = pl.program_id(0)
    i = pl.program_id(1)

    @pl.when(i == 0)
    def _():
        o_ref[...] = jnp.zeros_like(o_ref)

    step = c * steps_per_split + i          # global (unclamped) step index
    row0 = step * row_tile                  # first global row of this block

    def accumulate(masked):
        def chunk_body(ci, carry):
            s_it, s_p, s_t, s_b = carry
            r = pl.multiple_of(ci * chunk_rows, chunk_rows)
            x = x_ref[pl.ds(r, chunk_rows), :].astype(jnp.float32)
            t = t_ref[pl.ds(r, chunk_rows), :].astype(jnp.float32)
            if masked:
                rows = row0 + r + lax.broadcasted_iota(
                    jnp.int32, (chunk_rows, LANE), 0)
                valid = rows < n_rows
                # x=-1e9 / t=0 makes every partial-sum term exactly zero:
                # sigmoid(-1e9)=0, clamped BCE term 0 (re-checked for the
                # fused sp_neg/bce formulation below).
                x = jnp.where(valid, x, -1e9)
                t = jnp.where(valid, t, 0.0)

            # sigmoid + stable BCE via one shared exp and one log1p (EUP).
            e = jnp.exp(-jnp.abs(x))
            inv = 1.0 / (1.0 + e)
            p = jnp.where(x >= 0, inv, e * inv)            # sigmoid(x)

            sp_pos = jnp.maximum(x, 0.0) + jnp.log1p(e)    # softplus( x) = -log(1-p)
            sp_neg = sp_pos - x                            # softplus(-x) = -log(p)
            # torch F.binary_cross_entropy clamps each log term at -100.
            min_pos = jnp.minimum(sp_pos, 100.0)
            min_neg = jnp.minimum(sp_neg, 100.0)
            bce = min_pos + t * (min_neg - min_pos)

            def fold(v):                                   # (chunk,128)->(8,128)
                return v.reshape(chunk_rows // 8, 8, LANE).sum(axis=0)

            return (s_it + fold(p * t), s_p + fold(p),
                    s_t + fold(t), s_b + fold(bce))

        zero = jnp.zeros((8, LANE), jnp.float32)
        s_it, s_p, s_t, s_b = lax.fori_loop(
            0, n_chunks, chunk_body, (zero, zero, zero, zero), unroll=True)
        o_ref[0, 0] += s_it       # intersection
        o_ref[0, 1] += s_p        # sum of predictions
        o_ref[0, 2] += s_t        # sum of targets
        o_ref[0, 3] += s_b        # sum of per-element BCE

    block_is_full = row0 + row_tile <= n_rows

    @pl.when(block_is_full)
    def _():
        accumulate(masked=False)

    @pl.when(jnp.logical_not(block_is_full))
    def _():
        accumulate(masked=True)


def dice_bce_loss(inputs, targets, smooth: int = 1):
    """Pallas equivalent of DiceBCELoss.forward(inputs, targets, smooth).

    Both streams are read in their native dtype (bf16 logits / int8 or bf16
    targets stay narrow on the HBM wire) and upcast in-kernel."""
    n = int(inputs.size)
    x = inputs.reshape(-1)                     # keep native dtype
    t = targets.reshape(-1)
    if t.dtype == jnp.bool_:
        t = t.astype(jnp.int8)                 # 1-byte stream for boolean masks

    # Only wrapper-side pad: < 128 elements, only when n % 128 != 0 (a
    # (rows,128) view is impossible otherwise).  Usual case: zero copies.
    rem = n % LANE
    if rem:
        pad = LANE - rem
        x = jnp.pad(x, (0, pad), constant_values=-1e9)
        t = jnp.pad(t, (0, pad))
    n_rows = x.size // LANE

    # Sublane packing requirement from BOTH streams: 8 * (4 / itemsize).
    pack = max(4 // jnp.dtype(x.dtype).itemsize,
               4 // jnp.dtype(t.dtype).itemsize, 1)
    min_rows = 8 * pack

    row_tile = min(MAX_ROW_TILE, _round_up(n_rows, min_rows))
    if row_tile > CHUNK_ROWS:
        chunk_rows = CHUNK_ROWS
        row_tile = _round_up(row_tile, chunk_rows)   # stays <= MAX_ROW_TILE
    else:
        chunk_rows = row_tile
    n_chunks = row_tile // chunk_rows
    total_steps = -(-n_rows // row_tile)

    # Always take the 2-way megacore split when there is more than one step
    # (v7x: 2 TensorCores; a harmless serial loop on v5e/v6e).  Odd counts get
    # one duplicate step: index clamped below, contribution masked in-kernel.
    num_splits = 2 if total_steps >= 2 else 1
    steps_per_split = -(-total_steps // num_splits)

    x2 = x.reshape(n_rows, LANE)
    t2 = t.reshape(n_rows, LANE)

    def in_map(c, i):
        return (jnp.minimum(c * steps_per_split + i, total_steps - 1), 0)

    kernel = functools.partial(
        _dice_bce_kernel, n_rows=n_rows, row_tile=row_tile,
        chunk_rows=chunk_rows, n_chunks=n_chunks,
        steps_per_split=steps_per_split)

    parts = pl.pallas_call(
        kernel,
        out_shape=jax.ShapeDtypeStruct((num_splits, 4, 8, LANE), jnp.float32),
        grid_spec=pltpu.PrefetchScalarGridSpec(
            num_scalar_prefetch=0,
            grid=(num_splits, steps_per_split),
            in_specs=[
                pl.BlockSpec((row_tile, LANE), in_map),
                pl.BlockSpec((row_tile, LANE), in_map),
            ],
            out_specs=pl.BlockSpec((1, 4, 8, LANE), lambda c, i: (c, 0, 0, 0)),
        ),
        compiler_params=pltpu.CompilerParams(
            dimension_semantics=("parallel", "arbitrary"),
            vmem_limit_bytes=32 * 1024 * 1024,
        ),
    )(x2, t2)

    # Tiny cross-lane reduction + scalar combine outside the streaming kernel.
    sums = jnp.sum(parts, axis=(0, 2, 3))          # (4,)
    intersection, p_sum, t_sum, bce_sum = sums[0], sums[1], sums[2], sums[3]
    smooth_f = jnp.float32(smooth)
    dice_loss = 1.0 - (2.0 * intersection + smooth_f) / (p_sum + t_sum + smooth_f)
    bce_mean = bce_sum / jnp.float32(n)
    return bce_mean + dice_loss


def _reference(inputs, targets, smooth: int = 1):
    p = jax.nn.sigmoid(inputs.astype(jnp.float32)).reshape(-1)
    t = targets.astype(jnp.float32).reshape(-1)
    intersection = jnp.sum(p * t)
    dice = 1.0 - (2.0 * intersection + smooth) / (jnp.sum(p) + jnp.sum(t) + smooth)
    log_p = jnp.maximum(jnp.log(p), -100.0)
    log_1mp = jnp.maximum(jnp.log(1.0 - p), -100.0)
    bce = jnp.mean(-(t * log_p + (1.0 - t) * log_1mp))
    return bce + dice


if __name__ == "__main__":
    key = jax.random.PRNGKey(0)
    k1, k2 = jax.random.split(key)
    # Segmentation-style inputs: logits (N,C,H,W) and binary targets.
    inputs = jax.random.normal(k1, (2, 4, 16, 16), dtype=jnp.float32)
    targets = (jax.random.uniform(k2, (2, 4, 16, 16)) > 0.5).astype(jnp.float32)

    loss = jax.block_until_ready(dice_bce_loss(inputs, targets, smooth=1))
    ref = jax.block_until_ready(_reference(inputs, targets, smooth=1))

    assert jnp.allclose(loss, ref, rtol=1e-5, atol=1e-5), (loss, ref)
    print("KERNEL_OK")
</pallas_src>

<mosaic_0001>
module attributes {stable_mosaic.version = 11 : i64} {
  func.func @_dice_bce_kernel(%arg0: i32, %arg1: i32, %arg2: memref<16x128xf32, #tpu.memory_space<vmem>>, %arg3: memref<16x128xf32, #tpu.memory_space<vmem>>, %arg4: memref<1x4x8x128xf32, #tpu.memory_space<vmem>>) attributes {dimension_semantics = [#tpu.dimension_semantics<parallel>, #tpu.dimension_semantics<arbitrary>], iteration_bounds = array<i64: 1, 1>, scalar_prefetch = 0 : i64, scratch_operands = 0 : i64, tpu.core_type = #tpu.core_type<tc>, window_params = [{transform_indices = @transform_0, window_bounds = array<i64: 16, 128>}, {transform_indices = @transform_1, window_bounds = array<i64: 16, 128>}, {transform_indices = @transform_2, window_bounds = array<i64: 1, 4, 8, 128>}]} {
    %c0_i32 = arith.constant 0 : i32
    %0 = arith.cmpi eq, %arg1, %c0_i32 : i32
    %1 = arith.extui %0 : i1 to i32
    %c0_i32_0 = arith.constant 0 : i32
    %2 = arith.cmpi ne, %1, %c0_i32_0 : i32
    scf.if %2 {
      %cst = arith.constant 0.000000e+00 : f32
      %13 = vector.broadcast %cst : f32 to vector<1x4x8x128xf32>
      %c0 = arith.constant 0 : index
      %c0_5 = arith.constant 0 : index
      %c0_6 = arith.constant 0 : index
      %c0_7 = arith.constant 0 : index
      %14 = vector.load %arg4[%c0, %c0_5, %c0_6, %c0_7] : memref<1x4x8x128xf32, #tpu.memory_space<vmem>>, vector<1x4x8x128xf32>
      tpu.vector_store %arg4[%c0, %c0_5, %c0_6, %c0_7], %13 {strides = array<i32>} : memref<1x4x8x128xf32, #tpu.memory_space<vmem>>, vector<1x4x8x128xf32>,
    } else {
    }
    %c1_i32 = arith.constant 1 : i32
    %3 = arith.muli %arg0, %c1_i32 : i32
    %4 = arith.addi %3, %arg1 : i32
    %c16_i32 = arith.constant 16 : i32
    %5 = arith.muli %4, %c16_i32 : i32
    %c16_i32_1 = arith.constant 16 : i32
    %6 = arith.addi %5, %c16_i32_1 : i32
    %c16_i32_2 = arith.constant 16 : i32
    %7 = arith.cmpi sle, %6, %c16_i32_2 : i32
    %8 = arith.extui %7 : i1 to i32
    %c0_i32_3 = arith.constant 0 : i32
    %9 = arith.cmpi ne, %8, %c0_i32_3 : i32
    scf.if %9 {
      %cst = arith.constant 0.000000e+00 : f32
      %13 = vector.broadcast %cst : f32 to vector<8x128xf32>
      %c0_i32_5 = arith.constant 0 : i32
      %c16_i32_6 = arith.constant 16 : i32
      %14 = arith.muli %c0_i32_5, %c16_i32_6 : i32
      %15 = tpu.assume_multiple %14, 16 : i32
      %16 = arith.index_cast %15 : i32 to index
      %c0 = arith.constant 0 : index
      %17 = vector.load %arg2[%16, %c0] : memref<16x128xf32, #tpu.memory_space<vmem>>, vector<16x128xf32>
      %18 = arith.index_cast %15 : i32 to index
      %c0_7 = arith.constant 0 : index
      %19 = vector.load %arg3[%18, %c0_7] : memref<16x128xf32, #tpu.memory_space<vmem>>, vector<16x128xf32>
      %20 = math.absf %17 : vector<16x128xf32>
      %cst_8 = arith.constant 0.000000e+00 : f32
      %21 = vector.broadcast %cst_8 : f32 to vector<16x128xf32>
      %22 = arith.subf %21, %20 : vector<16x128xf32>
      %23 = math.exp %22 : vector<16x128xf32>
      %cst_9 = arith.constant 1.000000e+00 : f32
      %24 = vector.broadcast %cst_9 : f32 to vector<16x128xf32>
      %25 = arith.addf %24, %23 : vector<16x128xf32>
      %cst_10 = arith.constant 1.000000e+00 : f32
      %26 = vector.broadcast %cst_10 : f32 to vector<16x128xf32>
      %27 = arith.divf %26, %25 : vector<16x128xf32>
      %cst_11 = arith.constant 0.000000e+00 : f32
      %28 = vector.broadcast %cst_11 : f32 to vector<16x128xf32>
      %29 = arith.cmpf oge, %17, %28 : vector<16x128xf32>
      %30 = arith.mulf %23, %27 : vector<16x128xf32>
      %31 = arith.select %29, %27, %30 : vector<16x128xi1>, vector<16x128xf32>
      %cst_12 = arith.constant 0.000000e+00 : f32
      %32 = vector.broadcast %cst_12 : f32 to vector<16x128xf32>
      %33 = arith.maximumf %17, %32 : vector<16x128xf32>
      %34 = math.log1p %23 : vector<16x128xf32>
      %35 = arith.addf %33, %34 : vector<16x128xf32>
      %36 = arith.subf %35, %17 : vector<16x128xf32>
      %cst_13 = arith.constant 1.000000e+02 : f32
      %37 = vector.broadcast %cst_13 : f32 to vector<16x128xf32>
      %38 = arith.minimumf %35, %37 : vector<16x128xf32>
      %cst_14 = arith.constant 1.000000e+02 : f32
      %39 = vector.broadcast %cst_14 : f32 to vector<16x128xf32>
      %40 = arith.minimumf %36, %39 : vector<16x128xf32>
      %41 = arith.subf %40, %38 : vector<16x128xf32>
      %42 = arith.mulf %19, %41 : vector<16x128xf32>
      %43 = arith.addf %38, %42 : vector<16x128xf32>
      %44 = arith.mulf %31, %19 : vector<16x128xf32>
      %45 = vector.shape_cast %44 : vector<16x128xf32> to vector<2x8x128xf32>
      %cst_15 = arith.constant dense<0.000000e+00> : vector<8x128xf32>
      %46 = vector.multi_reduction <add>, %45, %cst_15 [0] : vector<2x8x128xf32> to vector<8x128xf32>
      %47 = arith.addf %13, %46 : vector<8x128xf32>
      %48 = vector.shape_cast %31 : vector<16x128xf32> to vector<2x8x128xf32>
      %cst_16 = arith.constant dense<0.000000e+00> : vector<8x128xf32>
      %49 = vector.multi_reduction <add>, %48, %cst_16 [0] : vector<2x8x128xf32> to vector<8x128xf32>
      %50 = arith.addf %13, %49 : vector<8x128xf32>
      %51 = vector.shape_cast %19 : vector<16x128xf32> to vector<2x8x128xf32>
      %cst_17 = arith.constant dense<0.000000e+00> : vector<8x128xf32>
      %52 = vector.multi_reduction <add>, %51, %cst_17 [0] : vector<2x8x128xf32> to vector<8x128xf32>
      %53 = arith.addf %13, %52 : vector<8x128xf32>
      %54 = vector.shape_cast %43 : vector<16x128xf32> to vector<2x8x128xf32>
      %cst_18 = arith.constant dense<0.000000e+00> : vector<8x128xf32>
      %55 = vector.multi_reduction <add>, %54, %cst_18 [0] : vector<2x8x128xf32> to vector<8x128xf32>
      %56 = arith.addf %13, %55 : vector<8x128xf32>
      %c1_i32_19 = arith.constant 1 : i32
      %c0_20 = arith.constant 0 : index
      %c0_21 = arith.constant 0 : index
      %c0_22 = arith.constant 0 : index
      %c0_23 = arith.constant 0 : index
      %57 = vector.load %arg4[%c0_20, %c0_21, %c0_22, %c0_23] : memref<1x4x8x128xf32, #tpu.memory_space<vmem>>, vector<1x1x8x128xf32>
      %58 = vector.shape_cast %57 : vector<1x1x8x128xf32> to vector<8x128xf32>
      %59 = arith.addf %58, %47 : vector<8x128xf32>
      %c0_24 = arith.constant 0 : index
      %c0_25 = arith.constant 0 : index
      %c0_26 = arith.constant 0 : index
      %c0_27 = arith.constant 0 : index
      %60 = vector.load %arg4[%c0_24, %c0_25, %c0_26, %c0_27] : memref<1x4x8x128xf32, #tpu.memory_space<vmem>>, vector<1x1x8x128xf32>
      %61 = vector.shape_cast %60 : vector<1x1x8x128xf32> to vector<8x128xf32>
      %62 = vector.shape_cast %59 : vector<8x128xf32> to vector<1x1x8x128xf32>
      tpu.vector_store %arg4[%c0_24, %c0_25, %c0_26, %c0_27], %62 {strides = array<i32>} : memref<1x4x8x128xf32, #tpu.memory_space<vmem>>, vector<1x1x8x128xf32>,
      %c0_28 = arith.constant 0 : index
      %c1 = arith.constant 1 : index
      %c0_29 = arith.constant 0 : index
      %c0_30 = arith.constant 0 : index
      %63 = vector.load %arg4[%c0_28, %c1, %c0_29, %c0_30] : memref<1x4x8x128xf32, #tpu.memory_space<vmem>>, vector<1x1x8x128xf32>
      %64 = vector.shape_cast %63 : vector<1x1x8x128xf32> to vector<8x128xf32>
      %65 = arith.addf %64, %50 : vector<8x128xf32>
      %c0_31 = arith.constant 0 : index
      %c1_32 = arith.constant 1 : index
      %c0_33 = arith.constant 0 : index
      %c0_34 = arith.constant 0 : index
      %66 = vector.load %arg4[%c0_31, %c1_32, %c0_33, %c0_34] : memref<1x4x8x128xf32, #tpu.memory_space<vmem>>, vector<1x1x8x128xf32>
      %67 = vector.shape_cast %66 : vector<1x1x8x128xf32> to vector<8x128xf32>
      %68 = vector.shape_cast %65 : vector<8x128xf32> to vector<1x1x8x128xf32>
      tpu.vector_store %arg4[%c0_31, %c1_32, %c0_33, %c0_34], %68 {strides = array<i32>} : memref<1x4x8x128xf32, #tpu.memory_space<vmem>>, vector<1x1x8x128xf32>,
      %c0_35 = arith.constant 0 : index
      %c2 = arith.constant 2 : index
      %c0_36 = arith.constant 0 : index
      %c0_37 = arith.constant 0 : index
      %69 = vector.load %arg4[%c0_35, %c2, %c0_36, %c0_37] : memref<1x4x8x128xf32, #tpu.memory_space<vmem>>, vector<1x1x8x128xf32>
      %70 = vector.shape_cast %69 : vector<1x1x8x128xf32> to vector<8x128xf32>
      %71 = arith.addf %70, %53 : vector<8x128xf32>
      %c0_38 = arith.constant 0 : index
      %c2_39 = arith.constant 2 : index
      %c0_40 = arith.constant 0 : index
      %c0_41 = arith.constant 0 : index
      %72 = vector.load %arg4[%c0_38, %c2_39, %c0_40, %c0_41] : memref<1x4x8x128xf32, #tpu.memory_space<vmem>>, vector<1x1x8x128xf32>
      %73 = vector.shape_cast %72 : vector<1x1x8x128xf32> to vector<8x128xf32>
      %74 = vector.shape_cast %71 : vector<8x128xf32> to vector<1x1x8x128xf32>
      tpu.vector_store %arg4[%c0_38, %c2_39, %c0_40, %c0_41], %74 {strides = array<i32>} : memref<1x4x8x128xf32, #tpu.memory_space<vmem>>, vector<1x1x8x128xf32>,
      %c0_42 = arith.constant 0 : index
      %c3 = arith.constant 3 : index
      %c0_43 = arith.constant 0 : index
      %c0_44 = arith.constant 0 : index
      %75 = vector.load %arg4[%c0_42, %c3, %c0_43, %c0_44] : memref<1x4x8x128xf32, #tpu.memory_space<vmem>>, vector<1x1x8x128xf32>
      %76 = vector.shape_cast %75 : vector<1x1x8x128xf32> to vector<8x128xf32>
      %77 = arith.addf %76, %56 : vector<8x128xf32>
      %c0_45 = arith.constant 0 : index
      %c3_46 = arith.constant 3 : index
      %c0_47 = arith.constant 0 : index
      %c0_48 = arith.constant 0 : index
      %78 = vector.load %arg4[%c0_45, %c3_46, %c0_47, %c0_48] : memref<1x4x8x128xf32, #tpu.memory_space<vmem>>, vector<1x1x8x128xf32>
      %79 = vector.shape_cast %78 : vector<1x1x8x128xf32> to vector<8x128xf32>
      %80 = vector.shape_cast %77 : vector<8x128xf32> to vector<1x1x8x128xf32>
      tpu.vector_store %arg4[%c0_45, %c3_46, %c0_47, %c0_48], %80 {strides = array<i32>} : memref<1x4x8x128xf32, #tpu.memory_space<vmem>>, vector<1x1x8x128xf32>,
    } else {
    }
    %true = arith.constant true
    %10 = arith.xori %7, %true : i1
    %11 = arith.extui %10 : i1 to i32
    %c0_i32_4 = arith.constant 0 : i32
    %12 = arith.cmpi ne, %11, %c0_i32_4 : i32
    scf.if %12 {
      %cst = arith.constant 0.000000e+00 : f32
      %13 = vector.broadcast %cst : f32 to vector<8x128xf32>
      %c0_i32_5 = arith.constant 0 : i32
      %c16_i32_6 = arith.constant 16 : i32
      %14 = arith.muli %c0_i32_5, %c16_i32_6 : i32
      %15 = tpu.assume_multiple %14, 16 : i32
      %16 = arith.index_cast %15 : i32 to index
      %c0 = arith.constant 0 : index
      %17 = vector.load %arg2[%16, %c0] : memref<16x128xf32, #tpu.memory_space<vmem>>, vector<16x128xf32>
      %18 = arith.index_cast %15 : i32 to index
      %c0_7 = arith.constant 0 : index
      %19 = vector.load %arg3[%18, %c0_7] : memref<16x128xf32, #tpu.memory_space<vmem>>, vector<16x128xf32>
      %20 = arith.addi %5, %15 : i32
      %21 = tpu.iota {dimensions = array<i32: 0>} : vector<16x128xi32>
      %22 = vector.broadcast %20 : i32 to vector<16x128xi32>
      %23 = arith.addi %22, %21 : vector<16x128xi32>
      %c16_i32_8 = arith.constant 16 : i32
      %24 = vector.broadcast %c16_i32_8 : i32 to vector<16x128xi32>
      %25 = arith.cmpi slt, %23, %24 : vector<16x128xi32>
      %cst_9 = arith.constant -1.000000e+09 : f32
      %26 = vector.broadcast %cst_9 : f32 to vector<16x128xf32>
      %27 = arith.select %25, %17, %26 : vector<16x128xi1>, vector<16x128xf32>
      %cst_10 = arith.constant 0.000000e+00 : f32
      %28 = vector.broadcast %cst_10 : f32 to vector<16x128xf32>
      %29 = arith.select %25, %19, %28 : vector<16x128xi1>, vector<16x128xf32>
      %30 = math.absf %27 : vector<16x128xf32>
      %cst_11 = arith.constant 0.000000e+00 : f32
      %31 = vector.broadcast %cst_11 : f32 to vector<16x128xf32>
      %32 = arith.subf %31, %30 : vector<16x128xf32>
      %33 = math.exp %32 : vector<16x128xf32>
      %cst_12 = arith.constant 1.000000e+00 : f32
      %34 = vector.broadcast %cst_12 : f32 to vector<16x128xf32>
      %35 = arith.addf %34, %33 : vector<16x128xf32>
      %cst_13 = arith.constant 1.000000e+00 : f32
      %36 = vector.broadcast %cst_13 : f32 to vector<16x128xf32>
      %37 = arith.divf %36, %35 : vector<16x128xf32>
      %cst_14 = arith.constant 0.000000e+00 : f32
      %38 = vector.broadcast %cst_14 : f32 to vector<16x128xf32>
      %39 = arith.cmpf oge, %27, %38 : vector<16x128xf32>
      %40 = arith.mulf %33, %37 : vector<16x128xf32>
      %41 = arith.select %39, %37, %40 : vector<16x128xi1>, vector<16x128xf32>
      %cst_15 = arith.constant 0.000000e+00 : f32
      %42 = vector.broadcast %cst_15 : f32 to vector<16x128xf32>
      %43 = arith.maximumf %27, %42 : vector<16x128xf32>
      %44 = math.log1p %33 : vector<16x128xf32>
      %45 = arith.addf %43, %44 : vector<16x128xf32>
      %46 = arith.subf %45, %27 : vector<16x128xf32>
      %cst_16 = arith.constant 1.000000e+02 : f32
      %47 = vector.broadcast %cst_16 : f32 to vector<16x128xf32>
      %48 = arith.minimumf %45, %47 : vector<16x128xf32>
      %cst_17 = arith.constant 1.000000e+02 : f32
      %49 = vector.broadcast %cst_17 : f32 to vector<16x128xf32>
      %50 = arith.minimumf %46, %49 : vector<16x128xf32>
      %51 = arith.subf %50, %48 : vector<16x128xf32>
      %52 = arith.mulf %29, %51 : vector<16x128xf32>
      %53 = arith.addf %48, %52 : vector<16x128xf32>
      %54 = arith.mulf %41, %29 : vector<16x128xf32>
      %55 = vector.shape_cast %54 : vector<16x128xf32> to vector<2x8x128xf32>
      %cst_18 = arith.constant dense<0.000000e+00> : vector<8x128xf32>
      %56 = vector.multi_reduction <add>, %55, %cst_18 [0] : vector<2x8x128xf32> to vector<8x128xf32>
      %57 = arith.addf %13, %56 : vector<8x128xf32>
      %58 = vector.shape_cast %41 : vector<16x128xf32> to vector<2x8x128xf32>
      %cst_19 = arith.constant dense<0.000000e+00> : vector<8x128xf32>
      %59 = vector.multi_reduction <add>, %58, %cst_19 [0] : vector<2x8x128xf32> to vector<8x128xf32>
      %60 = arith.addf %13, %59 : vector<8x128xf32>
      %61 = vector.shape_cast %29 : vector<16x128xf32> to vector<2x8x128xf32>
      %cst_20 = arith.constant dense<0.000000e+00> : vector<8x128xf32>
      %62 = vector.multi_reduction <add>, %61, %cst_20 [0] : vector<2x8x128xf32> to vector<8x128xf32>
      %63 = arith.addf %13, %62 : vector<8x128xf32>
      %64 = vector.shape_cast %53 : vector<16x128xf32> to vector<2x8x128xf32>
      %cst_21 = arith.constant dense<0.000000e+00> : vector<8x128xf32>
      %65 = vector.multi_reduction <add>, %64, %cst_21 [0] : vector<2x8x128xf32> to vector<8x128xf32>
      %66 = arith.addf %13, %65 : vector<8x128xf32>
      %c1_i32_22 = arith.constant 1 : i32
      %c0_23 = arith.constant 0 : index
      %c0_24 = arith.constant 0 : index
      %c0_25 = arith.constant 0 : index
      %c0_26 = arith.constant 0 : index
      %67 = vector.load %arg4[%c0_23, %c0_24, %c0_25, %c0_26] : memref<1x4x8x128xf32, #tpu.memory_space<vmem>>, vector<1x1x8x128xf32>
      %68 = vector.shape_cast %67 : vector<1x1x8x128xf32> to vector<8x128xf32>
      %69 = arith.addf %68, %57 : vector<8x128xf32>
      %c0_27 = arith.constant 0 : index
      %c0_28 = arith.constant 0 : index
      %c0_29 = arith.constant 0 : index
      %c0_30 = arith.constant 0 : index
      %70 = vector.load %arg4[%c0_27, %c0_28, %c0_29, %c0_30] : memref<1x4x8x128xf32, #tpu.memory_space<vmem>>, vector<1x1x8x128xf32>
      %71 = vector.shape_cast %70 : vector<1x1x8x128xf32> to vector<8x128xf32>
      %72 = vector.shape_cast %69 : vector<8x128xf32> to vector<1x1x8x128xf32>
      tpu.vector_store %arg4[%c0_27, %c0_28, %c0_29, %c0_30], %72 {strides = array<i32>} : memref<1x4x8x128xf32, #tpu.memory_space<vmem>>, vector<1x1x8x128xf32>,
      %c0_31 = arith.constant 0 : index
      %c1 = arith.constant 1 : index
      %c0_32 = arith.constant 0 : index
      %c0_33 = arith.constant 0 : index
      %73 = vector.load %arg4[%c0_31, %c1, %c0_32, %c0_33] : memref<1x4x8x128xf32, #tpu.memory_space<vmem>>, vector<1x1x8x128xf32>
      %74 = vector.shape_cast %73 : vector<1x1x8x128xf32> to vector<8x128xf32>
      %75 = arith.addf %74, %60 : vector<8x128xf32>
      %c0_34 = arith.constant 0 : index
      %c1_35 = arith.constant 1 : index
      %c0_36 = arith.constant 0 : index
      %c0_37 = arith.constant 0 : index
      %76 = vector.load %arg4[%c0_34, %c1_35, %c0_36, %c0_37] : memref<1x4x8x128xf32, #tpu.memory_space<vmem>>, vector<1x1x8x128xf32>
      %77 = vector.shape_cast %76 : vector<1x1x8x128xf32> to vector<8x128xf32>
      %78 = vector.shape_cast %75 : vector<8x128xf32> to vector<1x1x8x128xf32>
      tpu.vector_store %arg4[%c0_34, %c1_35, %c0_36, %c0_37], %78 {strides = array<i32>} : memref<1x4x8x128xf32, #tpu.memory_space<vmem>>, vector<1x1x8x128xf32>,
      %c0_38 = arith.constant 0 : index
      %c2 = arith.constant 2 : index
      %c0_39 = arith.constant 0 : index
      %c0_40 = arith.constant 0 : index
      %79 = vector.load %arg4[%c0_38, %c2, %c0_39, %c0_40] : memref<1x4x8x128xf32, #tpu.memory_space<vmem>>, vector<1x1x8x128xf32>
      %80 = vector.shape_cast %79 : vector<1x1x8x128xf32> to vector<8x128xf32>
      %81 = arith.addf %80, %63 : vector<8x128xf32>
      %c0_41 = arith.constant 0 : index
      %c2_42 = arith.constant 2 : index
      %c0_43 = arith.constant 0 : index
      %c0_44 = arith.constant 0 : index
      %82 = vector.load %arg4[%c0_41, %c2_42, %c0_43, %c0_44] : memref<1x4x8x128xf32, #tpu.memory_space<vmem>>, vector<1x1x8x128xf32>
      %83 = vector.shape_cast %82 : vector<1x1x8x128xf32> to vector<8x128xf32>
      %84 = vector.shape_cast %81 : vector<8x128xf32> to vector<1x1x8x128xf32>
      tpu.vector_store %arg4[%c0_41, %c2_42, %c0_43, %c0_44], %84 {strides = array<i32>} : memref<1x4x8x128xf32, #tpu.memory_space<vmem>>, vector<1x1x8x128xf32>,
      %c0_45 = arith.constant 0 : index
      %c3 = arith.constant 3 : index
      %c0_46 = arith.constant 0 : index
      %c0_47 = arith.constant 0 : index
      %85 = vector.load %arg4[%c0_45, %c3, %c0_46, %c0_47] : memref<1x4x8x128xf32, #tpu.memory_space<vmem>>, vector<1x1x8x128xf32>
      %86 = vector.shape_cast %85 : vector<1x1x8x128xf32> to vector<8x128xf32>
      %87 = arith.addf %86, %66 : vector<8x128xf32>
      %c0_48 = arith.constant 0 : index
      %c3_49 = arith.constant 3 : index
      %c0_50 = arith.constant 0 : index
      %c0_51 = arith.constant 0 : index
      %88 = vector.load %arg4[%c0_48, %c3_49, %c0_50, %c0_51] : memref<1x4x8x128xf32, #tpu.memory_space<vmem>>, vector<1x1x8x128xf32>
      %89 = vector.shape_cast %88 : vector<1x1x8x128xf32> to vector<8x128xf32>
      %90 = vector.shape_cast %87 : vector<8x128xf32> to vector<1x1x8x128xf32>
      tpu.vector_store %arg4[%c0_48, %c3_49, %c0_50, %c0_51], %90 {strides = array<i32>} : memref<1x4x8x128xf32, #tpu.memory_space<vmem>>, vector<1x1x8x128xf32>,
    } else {
    }
    return
  }
  func.func @transform_0(%arg0: i32, %arg1: i32) -> (i32, i32) {
    %c1_i32 = arith.constant 1 : i32
    %0 = arith.muli %arg0, %c1_i32 : i32
    %1 = arith.addi %0, %arg1 : i32
    %c0_i32 = arith.constant 0 : i32
    %2 = arith.minsi %1, %c0_i32 : i32
    %c0_i32_0 = arith.constant 0 : i32
    %c0_i32_1 = arith.constant 0 : i32
    return %2, %c0_i32_0 : i32, i32
  }
  func.func @transform_1(%arg0: i32, %arg1: i32) -> (i32, i32) {
    %c1_i32 = arith.constant 1 : i32
    %0 = arith.muli %arg0, %c1_i32 : i32
    %1 = arith.addi %0, %arg1 : i32
    %c0_i32 = arith.constant 0 : i32
    %2 = arith.minsi %1, %c0_i32 : i32
    %c0_i32_0 = arith.constant 0 : i32
    %c0_i32_1 = arith.constant 0 : i32
    return %2, %c0_i32_0 : i32, i32
  }
  func.func @transform_2(%arg0: i32, %arg1: i32) -> (i32, i32, i32, i32) {
    %c0_i32 = arith.constant 0 : i32
    %c0_i32_0 = arith.constant 0 : i32
    %c0_i32_1 = arith.constant 0 : i32
    %c0_i32_2 = arith.constant 0 : i32
    return %arg0, %c0_i32, %c0_i32_0, %c0_i32_1 : i32, i32, i32, i32
  }
}

</mosaic_0001>

<llo_original>
// kernel: tpu_custom_call.1
$region0: #{tpu_custom_call.1}
  #allocation0 [shape = 'u32[]', space=smem, size = 0x4, offset = 0x4, fixed_abs, tag = 'smem constant byte address 0x4 - core index']
  #allocation1 [shape = 'u32[144,128]{1,0:T(1,128)}', space=vmem, size = 0x12000, scoped, tag = 'internal scratch']
  %s0 = inlined_call_operand.hbm [shape: f32[16,128], index: 0, kind: input, shape index: {}]
  %s1 = inlined_call_operand.hbm [shape: f32[16,128], index: 1, kind: input, shape index: {}]
  %s2 = inlined_call_operand.hbm [shape: f32[1,4,8,128], index: 2, kind: output, shape index: {}]
  %s3 = sld [smem:[#allocation0]]
  $region38: #{tpu_custom_call.1} parent=0
    _
  %s5 = ssub.s32 1, %s3
  %s6 = scalar_select 0, %s5, %s3
  $region1: #{tpu_custom_call.1} parent=0
    #allocation2 [shape = 'u8[8192]{0}', space=vmem, size = 0x2000, scoped, tag = 'input window, operand 0, single buffered']
    #allocation3 [shape = 's32[1]{0}', space=sflag, size = 0x4, scoped, tag = 'scoped memory for tpu_custom_call.1']
    #allocation4 [shape = 's32[1]{0}', space=sflag, size = 0x4, scoped, tag = 'scoped memory for tpu_custom_call.1']
    #allocation5 [shape = 'u8[8192]{0}', space=vmem, size = 0x2000, scoped, tag = 'input window, operand 1, single buffered']
    #allocation6 [shape = 's32[1]{0}', space=sflag, size = 0x4, scoped, tag = 'scoped memory for tpu_custom_call.1']
    #allocation7 [shape = 'u8[16384]{0}', space=vmem, size = 0x4000, scoped, tag = 'output window, operand 0, single buffered']
    %7 = vsyncpa [#allocation3], 0
    %8 = vsyncpa [#allocation6], 0
    %9 = vsyncpa [#allocation4], 0
    // Predicated region
    $region2: #{tpu_custom_call.1} parent=1 // pred_check
      _
    $region3: #{tpu_custom_call.1} parent=1 // pred_check_branch
      %11 = sbr.rel (0) target = $region5
    $region4: #{tpu_custom_call.1} parent=1 // pred_region
      %s12 = sadd.s32 0, 0
      %p13 = scmp.lt.s32.totalorder %s12, 0
      %s14 = scalar_select %p13, %s12, 0
      %s15 = smul.u32 2, %s14
      %s17 = ssub.s32 256, 256
      %18 = vsyncadd [#allocation3], %s17
      %s19 = smul.addr %s15, 128
      %s20 = scalar_lea.hbm %s0, %s19
      %s21 = sshll.u32 [#allocation2], 4
      %s22 = int_to_ptr.vmem [resolvable:$true] %s21
      %27 = dma.hbm_to_vmem [thread:$0]  %s20, 256, %s22, [#allocation3], 128, 128, 8
    $region5: #{tpu_custom_call.1} parent=1 // pred_fallthru
      _
    // Predicated region
    $region6: #{tpu_custom_call.1} parent=1 // pred_check
      _
    $region7: #{tpu_custom_call.1} parent=1 // pred_check_branch
      %29 = sbr.rel (0) target = $region9
    $region8: #{tpu_custom_call.1} parent=1 // pred_region
      %s30 = sadd.s32 0, 0
      %p31 = scmp.lt.s32.totalorder %s30, 0
      %s32 = scalar_select %p31, %s30, 0
      %s33 = smul.u32 2, %s32
      %s35 = ssub.s32 256, 256
      %36 = vsyncadd [#allocation6], %s35
      %s37 = smul.addr %s33, 128
      %s38 = scalar_lea.hbm %s1, %s37
      %s39 = sshll.u32 [#allocation5], 4
      %s40 = int_to_ptr.vmem [resolvable:$true] %s39
      %45 = dma.hbm_to_vmem [thread:$0]  %s38, 256, %s40, [#allocation6], 128, 128, 8
    $region9: #{tpu_custom_call.1} parent=1 // pred_fallthru
      _
    // Predicated region
    $region10: #{tpu_custom_call.1} parent=1 // pred_check
      _
    $region11: #{tpu_custom_call.1} parent=1 // pred_check_branch
      %47 = sbr.rel (0) target = $region13
    $region12: #{tpu_custom_call.1} parent=1 // pred_region
      %48 = dma.done [#allocation3], 256
    $region13: #{tpu_custom_call.1} parent=1 // pred_fallthru
      _
    // Predicated region
    $region14: #{tpu_custom_call.1} parent=1 // pred_check
      _
    $region15: #{tpu_custom_call.1} parent=1 // pred_check_branch
      %50 = sbr.rel (0) target = $region17
    $region16: #{tpu_custom_call.1} parent=1 // pred_region
      %51 = dma.done [#allocation6], 256
    $region17: #{tpu_custom_call.1} parent=1 // pred_fallthru
      _
    %s52 = sadd.s32 0, 0
    %p53 = scmp.lt.s32.totalorder %s52, 0
    %s54 = scalar_select %p53, %s52, 0
    %s55 = smul.u32 2, %s54
    %s56 = sadd.s32 0, 0
    %p57 = scmp.lt.s32.totalorder %s56, 0
    %s58 = scalar_select %p57, %s56, 0
    %s59 = smul.u32 2, %s58
    %p60 = scmp.eq.s32.totalorder 0, 0
    // Predicated region
    $region18: #{tpu_custom_call.1} parent=1 // pred_check
      %p61 = pneg %p60
    $region19: #{tpu_custom_call.1} parent=1 // pred_check_branch
      %63 = sbr.rel (%p61) target = $region21
    $region20: #{tpu_custom_call.1} parent=1 // pred_region
      %64 = vst [vmem:[#allocation7] sm:$0xff] 0.0
      %65 = vst [vmem:[#allocation7 + $0x8] sm:$0xff] 0.0
      %66 = vst [vmem:[#allocation7 + $0x10] sm:$0xff] 0.0
      %67 = vst [vmem:[#allocation7 + $0x18] sm:$0xff] 0.0
    $region21: #{tpu_custom_call.1} parent=1 // pred_fallthru
      _
    %s68 = sadd.s32 0, 0
    %s69 = smul.u32 %s68, 16
    %s70 = sadd.s32 %s69, 16
    %p71 = scmp.le.s32.totalorder %s70, 16
    // Predicated region
    $region22: #{tpu_custom_call.1} parent=1 // pred_check
      %p72 = pneg %p71
    $region23: #{tpu_custom_call.1} parent=1 // pred_check_branch
      %74 = sbr.rel (%p72) target = $region25
    $region24: #{tpu_custom_call.1} parent=1 // pred_region
      %v75 = vld [vmem:[#allocation2] sm:$0xff]
      %v76 = vld [vmem:[#allocation2 + $0x8] sm:$0xff]
      %v77 = vld [vmem:[#allocation5] sm:$0xff]
      %v78 = vld [vmem:[#allocation5 + $0x8] sm:$0xff]
      %v79 = vand.u32 2147483647, %v75
      %v80 = vand.u32 2147483647, %v76
      %v81 = vsub.f32 0.0, %v79
      %v82 = vsub.f32 0.0, %v80
      %v83 = vmul.f32 %v81, 1.442695
      %v84 = vpow.pop %v83
      %v85 = vmul.f32 %v82, 1.442695
      %v86 = vpow.pop %v85
      %v87 = vadd.f32 %v84, 1.0
      %v88 = vadd.f32 %v86, 1.0
      %v89 = vrcp.pop %v87
      %v90 = vmul.f32 1.0, %v89
      %v91 = vrcp.pop %v88
      %v92 = vmul.f32 1.0, %v91
      %vm93 = vcmp.ge.f32.partialorder %v75, 0.0
      %vm94 = vcmp.ge.f32.partialorder %v76, 0.0
      %v95 = vmul.f32 %v84, %v90
      %v96 = vmul.f32 %v86, %v92
      %v97 = vsel %vm93, %v90, %v95
      %v98 = vsel %vm94, %v92, %v96
      %v99 = vmax.f32 %v75, 0.0
      %v100 = vmax.f32 %v76, 0.0
      %v101 = vadd.f32 %v84, 1.0
      %v102 = vlog2.pop %v101
      %v103 = vmul.f32 %v102, 0.6931472
      %v104 = vmul.f32 -0.5, %v84
      %v105 = vadd.f32 %v104, 1.0
      %v106 = vmul.f32 %v105, %v84
      %v107 = vand.u32 2147483647, %v84
      %vm108 = vcmp.lt.f32.partialorder %v107, 0.0004427343
      %v109 = vsel %vm108, %v106, %v103
      %v110 = vadd.f32 %v86, 1.0
      %v111 = vlog2.pop %v110
      %v112 = vmul.f32 %v111, 0.6931472
      %v113 = vmul.f32 -0.5, %v86
      %v114 = vadd.f32 %v113, 1.0
      %v115 = vmul.f32 %v114, %v86
      %v116 = vand.u32 2147483647, %v86
      %vm117 = vcmp.lt.f32.partialorder %v116, 0.0004427343
      %v118 = vsel %vm117, %v115, %v112
      %v119 = vadd.f32 %v99, %v109
      %v120 = vadd.f32 %v100, %v118
      %v121 = vsub.f32 %v119, %v75
      %v122 = vsub.f32 %v120, %v76
      %v123 = vmin.f32 %v119, 100.0
      %v124 = vmin.f32 %v120, 100.0
      %v125 = vmin.f32 %v121, 100.0
      %v126 = vmin.f32 %v122, 100.0
      %v127 = vsub.f32 %v125, %v123
      %v128 = vsub.f32 %v126, %v124
      %v129 = vmul.f32 %v77, %v127
      %v130 = vmul.f32 %v78, %v128
      %v131 = vadd.f32 %v123, %v129
      %v132 = vadd.f32 %v124, %v130
      %v133 = vmul.f32 %v97, %v77
      %v134 = vmul.f32 %v98, %v78
      %v135 = vadd.f32 %v133, %v134
      %v136 = vadd.f32 %v135, 0.0
      %v137 = vadd.f32 %v97, %v98
      %v138 = vadd.f32 %v137, 0.0
      %v139 = vadd.f32 %v77, %v78
      %v140 = vadd.f32 %v139, 0.0
      %v141 = vadd.f32 %v131, %v132
      %v142 = vadd.f32 %v141, 0.0
      %v143 = vld [vmem:[#allocation7] sm:$0xff]
      %v144 = vadd.f32 %v143, %v136
      %145 = vst [vmem:[#allocation7] sm:$0xff] %v144
      %s146 = scalar_lea.vmem [#allocation7], 8
      %v147 = vld [vmem:[%s146] sm:$0xff]
      %v148 = vadd.f32 %v147, %v138
      %149 = vst [vmem:[%s146] sm:$0xff] %v148
      %s150 = scalar_lea.vmem [#allocation7], 16
      %v151 = vld [vmem:[%s150] sm:$0xff]
      %v152 = vadd.f32 %v151, %v140
      %153 = vst [vmem:[%s150] sm:$0xff] %v152
      %s154 = scalar_lea.vmem [#allocation7], 24
      %v155 = vld [vmem:[%s154] sm:$0xff]
      %v156 = vadd.f32 %v155, %v142
      %157 = vst [vmem:[%s154] sm:$0xff] %v156
    $region25: #{tpu_custom_call.1} parent=1 // pred_fallthru
      _
    %p158 = scmp.gt.s32.totalorder %s70, 16
    // Predicated region
    $region26: #{tpu_custom_call.1} parent=1 // pred_check
      %p159 = pneg %p158
    $region27: #{tpu_custom_call.1} parent=1 // pred_check_branch
      %161 = sbr.rel (%p159) target = $region29
    $region28: #{tpu_custom_call.1} parent=1 // pred_region
      %v162 = vld [vmem:[#allocation2] sm:$0xff]
      %v163 = vld [vmem:[#allocation2 + $0x8] sm:$0xff]
      %v164 = vld [vmem:[#allocation5] sm:$0xff]
      %v165 = vld [vmem:[#allocation5 + $0x8] sm:$0xff]
      %s166 = sadd.s32 %s69, 0
      %v167 = vlaneseq
      %v168 = vshrl.u32 %v167, 7
      %v169 = vadd.s32 %v168, 8
      %v170 = vstv %s166
      %v171 = vadd.s32 %v170, %v168
      %v172 = vadd.s32 %v170, %v169
      %vm173 = vcmp.lt.s32.totalorder %v171, 16
      %vm174 = vcmp.lt.s32.totalorder %v172, 16
      %v175 = vsel %vm173, %v162, -1e+09
      %v176 = vsel %vm174, %v163, -1e+09
      %v177 = vsel %vm173, %v164, 0.0
      %v178 = vsel %vm174, %v165, 0.0
      %v179 = vand.u32 2147483647, %v175
      %v180 = vand.u32 2147483647, %v176
      %v181 = vsub.f32 0.0, %v179
      %v182 = vsub.f32 0.0, %v180
      %v183 = vmul.f32 %v181, 1.442695
      %v184 = vpow.pop %v183
      %v185 = vmul.f32 %v182, 1.442695
      %v186 = vpow.pop %v185
      %v187 = vadd.f32 %v184, 1.0
      %v188 = vadd.f32 %v186, 1.0
      %v189 = vrcp.pop %v187
      %v190 = vmul.f32 1.0, %v189
      %v191 = vrcp.pop %v188
      %v192 = vmul.f32 1.0, %v191
      %vm193 = vcmp.ge.f32.partialorder %v175, 0.0
      %vm194 = vcmp.ge.f32.partialorder %v176, 0.0
      %v195 = vmul.f32 %v184, %v190
      %v196 = vmul.f32 %v186, %v192
      %v197 = vsel %vm193, %v190, %v195
      %v198 = vsel %vm194, %v192, %v196
      %v199 = vmax.f32 %v175, 0.0
      %v200 = vmax.f32 %v176, 0.0
      %v201 = vadd.f32 %v184, 1.0
      %v202 = vlog2.pop %v201
      %v203 = vmul.f32 %v202, 0.6931472
      %v204 = vmul.f32 -0.5, %v184
      %v205 = vadd.f32 %v204, 1.0
      %v206 = vmul.f32 %v205, %v184
      %v207 = vand.u32 2147483647, %v184
      %vm208 = vcmp.lt.f32.partialorder %v207, 0.0004427343
      %v209 = vsel %vm208, %v206, %v203
      %v210 = vadd.f32 %v186, 1.0
      %v211 = vlog2.pop %v210
      %v212 = vmul.f32 %v211, 0.6931472
      %v213 = vmul.f32 -0.5, %v186
      %v214 = vadd.f32 %v213, 1.0
      %v215 = vmul.f32 %v214, %v186
      %v216 = vand.u32 2147483647, %v186
      %vm217 = vcmp.lt.f32.partialorder %v216, 0.0004427343
      %v218 = vsel %vm217, %v215, %v212
      %v219 = vadd.f32 %v199, %v209
      %v220 = vadd.f32 %v200, %v218
      %v221 = vsub.f32 %v219, %v175
      %v222 = vsub.f32 %v220, %v176
      %v223 = vmin.f32 %v219, 100.0
      %v224 = vmin.f32 %v220, 100.0
      %v225 = vmin.f32 %v221, 100.0
      %v226 = vmin.f32 %v222, 100.0
      %v227 = vsub.f32 %v225, %v223
      %v228 = vsub.f32 %v226, %v224
      %v229 = vmul.f32 %v177, %v227
      %v230 = vmul.f32 %v178, %v228
      %v231 = vadd.f32 %v223, %v229
      %v232 = vadd.f32 %v224, %v230
      %v233 = vmul.f32 %v197, %v177
      %v234 = vmul.f32 %v198, %v178
      %v235 = vadd.f32 %v233, %v234
      %v236 = vadd.f32 %v235, 0.0
      %v237 = vadd.f32 %v197, %v198
      %v238 = vadd.f32 %v237, 0.0
      %v239 = vadd.f32 %v177, %v178
      %v240 = vadd.f32 %v239, 0.0
      %v241 = vadd.f32 %v231, %v232
      %v242 = vadd.f32 %v241, 0.0
      %v243 = vld [vmem:[#allocation7] sm:$0xff]
      %v244 = vadd.f32 %v243, %v236
      %245 = vst [vmem:[#allocation7] sm:$0xff] %v244
      %s246 = scalar_lea.vmem [#allocation7], 8
      %v247 = vld [vmem:[%s246] sm:$0xff]
      %v248 = vadd.f32 %v247, %v238
      %249 = vst [vmem:[%s246] sm:$0xff] %v248
      %s250 = scalar_lea.vmem [#allocation7], 16
      %v251 = vld [vmem:[%s250] sm:$0xff]
      %v252 = vadd.f32 %v251, %v240
      %253 = vst [vmem:[%s250] sm:$0xff] %v252
      %s254 = scalar_lea.vmem [#allocation7], 24
      %v255 = vld [vmem:[%s254] sm:$0xff]
      %v256 = vadd.f32 %v255, %v242
      %257 = vst [vmem:[%s254] sm:$0xff] %v256
    $region29: #{tpu_custom_call.1} parent=1 // pred_fallthru
      _
    // Predicated region
    $region30: #{tpu_custom_call.1} parent=1 // pred_check
      _
    $region31: #{tpu_custom_call.1} parent=1 // pred_check_branch
      %259 = sbr.rel (0) target = $region33
    $region32: #{tpu_custom_call.1} parent=1 // pred_region
      %s261 = ssub.s32 512, 512
      %262 = vsyncadd [#allocation4], %s261
      %s263 = sshll.u32 [#allocation7], 4
      %s264 = int_to_ptr.vmem [resolvable:$true] %s263
      %269 = dma.vmem_to_hbm [thread:$0]  %s264, 512, %s2, [#allocation4], 128, 128, 8
    $region33: #{tpu_custom_call.1} parent=1 // pred_fallthru
      _
    // Predicated region
    $region34: #{tpu_custom_call.1} parent=1 // pred_check
      _
    $region35: #{tpu_custom_call.1} parent=1 // pred_check_branch
      %271 = sbr.rel (0) target = $region37
    $region36: #{tpu_custom_call.1} parent=1 // pred_region
      %272 = dma.done [#allocation4], 512
    $region37: #{tpu_custom_call.1} parent=1 // pred_fallthru
      _
    %273 = vsyncpa [#allocation3], 1
    %274 = vsyncpa [#allocation6], 1
    %275 = vsyncpa [#allocation4], 1

</llo_original>
